<compile_context>
chip_gen: v5e
topology: v5e:2x2
jax: 0.10.0
libtpu: 0.0.40
codegen_flags: <defaults>
</compile_context>

<pallas_src>
import functools

import jax
import jax.numpy as jnp
from jax.experimental import pallas as pl
from jax.experimental.pallas import tpu as pltpu

_LANE = 128                 # TPU lane width; pad ragged output feature dim up to this.
_HIDDEN = (128, 512, 128)
_COMPUTE_DTYPE = jnp.bfloat16

_BM_CAP = 512               # big tiles amortize the ~0.35 us per-grid-step overhead
_NUM_CORES_HINT = 2         # v7x: 2 TensorCores -> aim for an even tile count >= 2


def _round_up(x, m):
    return (x + m - 1) // m * m


def _choose_bm(batch):
    """Batch-tile size: multiple of 8 sublanes, <= ~_BM_CAP rows, and (when the
    batch is big enough) an even number of tiles so v7x's two TCs both work."""
    rows = _round_up(batch, 8)
    if rows <= 8 * _NUM_CORES_HINT:
        return rows                                   # too small to split usefully
    tiles = max(_NUM_CORES_HINT,
                _round_up(pl.cdiv(rows, _BM_CAP), _NUM_CORES_HINT))
    return _round_up(pl.cdiv(rows, tiles), 8)


def _mlp_kernel(x_ref,
                w1_ref, b1_ref,
                w2_ref, b2_ref,
                w3_ref, b3_ref,
                w4_ref, b4_ref,
                o_ref):
    """Fused 4-layer MLP for one batch tile. Weights stay resident in VMEM."""
    # Raw f32 input tile; cast to bf16 MXU operands inside the kernel.
    x = x_ref[...].astype(_COMPUTE_DTYPE)

    h = jnp.dot(x, w1_ref[...], preferred_element_type=jnp.float32) + b1_ref[...]
    h = jnp.maximum(h.astype(_COMPUTE_DTYPE), 0)      # relu after bf16 cast (bf16 VALU)

    h = jnp.dot(h, w2_ref[...], preferred_element_type=jnp.float32) + b2_ref[...]
    h = jnp.maximum(h.astype(_COMPUTE_DTYPE), 0)

    h = jnp.dot(h, w3_ref[...], preferred_element_type=jnp.float32) + b3_ref[...]
    h = jnp.maximum(h.astype(_COMPUTE_DTYPE), 0)

    out = jnp.dot(h, w4_ref[...], preferred_element_type=jnp.float32) + b4_ref[...]
    o_ref[...] = out.astype(o_ref.dtype)              # bf16, lane-dense padded store


def prepare_params(params):
    """One-time parameter prep (pad ragged output dim 11 -> 128, cast weights to
    bf16, biases to f32). Call once and reuse -- NOT part of the per-call path."""
    out_size = params["w4"].shape[1]
    out_pad = _round_up(out_size, _LANE)
    prepped = {
        "w1": jnp.asarray(params["w1"], _COMPUTE_DTYPE),     # (in_size, 128)
        "b1": jnp.asarray(params["b1"], jnp.float32),        # (1, 128)
        "w2": jnp.asarray(params["w2"], _COMPUTE_DTYPE),     # (128, 512)
        "b2": jnp.asarray(params["b2"], jnp.float32),        # (1, 512)
        "w3": jnp.asarray(params["w3"], _COMPUTE_DTYPE),     # (512, 128)
        "b3": jnp.asarray(params["b3"], jnp.float32),        # (1, 128)
        "w4": jnp.pad(params["w4"], ((0, 0), (0, out_pad - out_size))
                      ).astype(_COMPUTE_DTYPE),               # (128, 128)
        "b4": jnp.pad(params["b4"], ((0, 0), (0, out_pad - out_size))
                      ).astype(jnp.float32),                  # (1, 128)
    }
    return prepped, out_size


@functools.partial(jax.jit, static_argnames=("out_size",))
def simple_decoder_forward(state_batch, prepped, *, out_size):
    """Pallas-backed forward pass of SimpleDecoder.

    state_batch: [B, input_size] float32 (fed raw; cast happens in-kernel).
    prepped:     output of prepare_params() (bf16 weights, f32 biases, padded).
    """
    batch, in_size = state_batch.shape
    d1, d2, d3 = _HIDDEN
    out_pad = prepped["w4"].shape[1]

    bm = _choose_bm(batch)
    grid = (pl.cdiv(batch, bm),)            # ragged last block masked by Pallas
    rows_eff = grid[0] * bm

    def pinned(shape):
        # Weights / biases: same block every grid step -> stay resident in VMEM.
        return pl.BlockSpec(shape, lambda i: (0, 0))

    flops = 2 * rows_eff * (in_size * d1 + d1 * d2 + d2 * d3 + d3 * out_pad)
    weight_bytes = sum(int(v.size) * v.dtype.itemsize for v in prepped.values())
    bytes_accessed = (weight_bytes
                      + batch * in_size * 4          # x read (f32)
                      + batch * out_pad * 2)         # out write (bf16)

    out = pl.pallas_call(
        _mlp_kernel,
        out_shape=jax.ShapeDtypeStruct((batch, out_pad), _COMPUTE_DTYPE),
        grid=grid,
        in_specs=[
            # x streamed over batch tiles; last dim == full array dim (34) so the
            # (8,128) rule is satisfied without wrapper padding.
            pl.BlockSpec((bm, in_size), lambda i: (i, 0)),
            pinned((in_size, d1)), pinned((1, d1)),
            pinned((d1, d2)),      pinned((1, d2)),
            pinned((d2, d3)),      pinned((1, d3)),
            pinned((d3, out_pad)), pinned((1, out_pad)),
        ],
        out_specs=pl.BlockSpec((bm, out_pad), lambda i: (i, 0)),
        compiler_params=pltpu.CompilerParams(
            dimension_semantics=("parallel",),
        ),
        cost_estimate=pl.CostEstimate(
            flops=flops, transcendentals=0, bytes_accessed=bytes_accessed),
    )(state_batch,
      prepped["w1"], prepped["b1"],
      prepped["w2"], prepped["b2"],
      prepped["w3"], prepped["b3"],
      prepped["w4"], prepped["b4"])

    return out[:, :out_size].astype(state_batch.dtype)


def init_params(key, input_size, output_size):
    """Deterministic synthetic parameters matching SimpleDecoder's layer shapes."""
    dims = [input_size, 128, 512, 128, output_size]
    params = {}
    for idx in range(4):
        k_w, k_b, key = jax.random.split(key, 3)
        fan_in, fan_out = dims[idx], dims[idx + 1]
        bound = 1.0 / jnp.sqrt(jnp.float32(fan_in))  # torch.nn.Linear default range
        w = jax.random.uniform(k_w, (fan_in, fan_out), jnp.float32, -bound, bound)
        b = jax.random.uniform(k_b, (1, fan_out), jnp.float32, -bound, bound)
        params[f"w{idx + 1}"] = w
        params[f"b{idx + 1}"] = b
    return params


def reference_forward(state_batch, params):
    """Pure-JAX reference with the same bf16-operand / f32-accumulate / bf16-store recipe."""
    h = state_batch.astype(_COMPUTE_DTYPE)
    for i in range(1, 5):
        w = params[f"w{i}"].astype(_COMPUTE_DTYPE)
        b = params[f"b{i}"].astype(jnp.float32)
        h = jnp.dot(h, w, preferred_element_type=jnp.float32) + b
        if i < 4:
            h = jnp.maximum(h.astype(_COMPUTE_DTYPE), 0)
    return h.astype(_COMPUTE_DTYPE).astype(state_batch.dtype)


if __name__ == "__main__":
    # Module hyper-parameters (defaults from SimpleDecoder.__init__):
    max_nodes_per_graph = 10
    node_dimension = 2
    input_size = 4 + max_nodes_per_graph + max_nodes_per_graph * node_dimension  # 34
    output_size = max_nodes_per_graph + 1                                        # 11

    key = jax.random.PRNGKey(0)
    key_x, key_p = jax.random.split(key)

    batch = 8
    state_batch = jax.random.normal(key_x, (batch, input_size), jnp.float32)
    params = init_params(key_p, input_size, output_size)

    # One-time parameter prep (pad/cast), kept OUT of the per-call path.
    prepped, out_size = prepare_params(params)

    out = simple_decoder_forward(state_batch, prepped, out_size=out_size)
    out = jax.block_until_ready(out)

    assert out.shape == (batch, output_size), out.shape
    ref = reference_forward(state_batch, params)
    assert jnp.allclose(out, ref, atol=1e-2, rtol=1e-2), "mismatch vs reference"

    # Sanity vs full-f32 math (loose, since MXU operands / output store are bf16).
    ref_f32 = state_batch
    for i in range(1, 5):
        ref_f32 = ref_f32 @ params[f"w{i}"] + params[f"b{i}"]
        if i < 4:
            ref_f32 = jnp.maximum(ref_f32, 0.0)
    assert jnp.allclose(out, ref_f32, atol=5e-2, rtol=5e-2), "mismatch vs f32 reference"

    print("KERNEL_OK")
</pallas_src>

<mosaic_0001>
module attributes {stable_mosaic.version = 11 : i64} {
  func.func @_mlp_kernel(%arg0: i32, %arg1: memref<8x34xf32, #tpu.memory_space<vmem>>, %arg2: memref<34x128xbf16, #tpu.memory_space<vmem>>, %arg3: memref<1x128xf32, #tpu.memory_space<vmem>>, %arg4: memref<128x512xbf16, #tpu.memory_space<vmem>>, %arg5: memref<1x512xf32, #tpu.memory_space<vmem>>, %arg6: memref<512x128xbf16, #tpu.memory_space<vmem>>, %arg7: memref<1x128xf32, #tpu.memory_space<vmem>>, %arg8: memref<128x128xbf16, #tpu.memory_space<vmem>>, %arg9: memref<1x128xf32, #tpu.memory_space<vmem>>, %arg10: memref<8x128xbf16, #tpu.memory_space<vmem>>) attributes {dimension_semantics = [#tpu.dimension_semantics<parallel>], iteration_bounds = array<i64: 1>, scalar_prefetch = 0 : i64, scratch_operands = 0 : i64, tpu.core_type = #tpu.core_type<tc>, window_params = [{transform_indices = @transform_0, window_bounds = array<i64: 8, 34>}, {pipeline_mode = #tpu.pipeline_mode<synchronous>, transform_indices = @transform_1, window_bounds = array<i64: 34, 128>}, {pipeline_mode = #tpu.pipeline_mode<synchronous>, transform_indices = @transform_2, window_bounds = array<i64: 1, 128>}, {pipeline_mode = #tpu.pipeline_mode<synchronous>, transform_indices = @transform_3, window_bounds = array<i64: 128, 512>}, {pipeline_mode = #tpu.pipeline_mode<synchronous>, transform_indices = @transform_4, window_bounds = array<i64: 1, 512>}, {pipeline_mode = #tpu.pipeline_mode<synchronous>, transform_indices = @transform_5, window_bounds = array<i64: 512, 128>}, {pipeline_mode = #tpu.pipeline_mode<synchronous>, transform_indices = @transform_6, window_bounds = array<i64: 1, 128>}, {pipeline_mode = #tpu.pipeline_mode<synchronous>, transform_indices = @transform_7, window_bounds = array<i64: 128, 128>}, {pipeline_mode = #tpu.pipeline_mode<synchronous>, transform_indices = @transform_8, window_bounds = array<i64: 1, 128>}, {transform_indices = @transform_9, window_bounds = array<i64: 8, 128>}]} {
    %c0 = arith.constant 0 : index
    %c0_0 = arith.constant 0 : index
    %0 = vector.load %arg1[%c0, %c0_0] : memref<8x34xf32, #tpu.memory_space<vmem>>, vector<8x34xf32>
    %1 = arith.truncf %0 : vector<8x34xf32> to vector<8x34xbf16>
    %c0_1 = arith.constant 0 : index
    %c0_2 = arith.constant 0 : index
    %2 = vector.load %arg2[%c0_1, %c0_2] : memref<34x128xbf16, #tpu.memory_space<vmem>>, vector<34x128xbf16>
    %cst = arith.constant dense<0.000000e+00> : vector<8x128xf32>
    %3 = tpu.matmul %1, %2, %cst {dimension_numbers = #tpu.dot_dimension_numbers<[1], [0], [0], [1], [0, 0, 1, 1], [], []>} : vector<8x34xbf16>, vector<34x128xbf16>, vector<8x128xf32> -> vector<8x128xf32>
    %c0_3 = arith.constant 0 : index
    %c0_4 = arith.constant 0 : index
    %4 = vector.load %arg3[%c0_3, %c0_4] : memref<1x128xf32, #tpu.memory_space<vmem>>, vector<1x128xf32>
    %5 = vector.broadcast %4 : vector<1x128xf32> to vector<8x128xf32>
    %6 = arith.addf %3, %5 : vector<8x128xf32>
    %7 = arith.truncf %6 : vector<8x128xf32> to vector<8x128xbf16>
    %cst_5 = arith.constant 0.000000e+00 : bf16
    %8 = vector.broadcast %cst_5 : bf16 to vector<8x128xbf16>
    %9 = arith.maximumf %7, %8 : vector<8x128xbf16>
    %c0_6 = arith.constant 0 : index
    %c0_7 = arith.constant 0 : index
    %10 = vector.load %arg4[%c0_6, %c0_7] : memref<128x512xbf16, #tpu.memory_space<vmem>>, vector<128x512xbf16>
    %cst_8 = arith.constant dense<0.000000e+00> : vector<8x512xf32>
    %11 = tpu.matmul %9, %10, %cst_8 {dimension_numbers = #tpu.dot_dimension_numbers<[1], [0], [0], [1], [0, 0, 1, 1], [], []>} : vector<8x128xbf16>, vector<128x512xbf16>, vector<8x512xf32> -> vector<8x512xf32>
    %c0_9 = arith.constant 0 : index
    %c0_10 = arith.constant 0 : index
    %12 = vector.load %arg5[%c0_9, %c0_10] : memref<1x512xf32, #tpu.memory_space<vmem>>, vector<1x512xf32>
    %13 = vector.broadcast %12 : vector<1x512xf32> to vector<8x512xf32>
    %14 = arith.addf %11, %13 : vector<8x512xf32>
    %15 = arith.truncf %14 : vector<8x512xf32> to vector<8x512xbf16>
    %cst_11 = arith.constant 0.000000e+00 : bf16
    %16 = vector.broadcast %cst_11 : bf16 to vector<8x512xbf16>
    %17 = arith.maximumf %15, %16 : vector<8x512xbf16>
    %c0_12 = arith.constant 0 : index
    %c0_13 = arith.constant 0 : index
    %18 = vector.load %arg6[%c0_12, %c0_13] : memref<512x128xbf16, #tpu.memory_space<vmem>>, vector<512x128xbf16>
    %cst_14 = arith.constant dense<0.000000e+00> : vector<8x128xf32>
    %19 = tpu.matmul %17, %18, %cst_14 {dimension_numbers = #tpu.dot_dimension_numbers<[1], [0], [0], [1], [0, 0, 1, 1], [], []>} : vector<8x512xbf16>, vector<512x128xbf16>, vector<8x128xf32> -> vector<8x128xf32>
    %c0_15 = arith.constant 0 : index
    %c0_16 = arith.constant 0 : index
    %20 = vector.load %arg7[%c0_15, %c0_16] : memref<1x128xf32, #tpu.memory_space<vmem>>, vector<1x128xf32>
    %21 = vector.broadcast %20 : vector<1x128xf32> to vector<8x128xf32>
    %22 = arith.addf %19, %21 : vector<8x128xf32>
    %23 = arith.truncf %22 : vector<8x128xf32> to vector<8x128xbf16>
    %cst_17 = arith.constant 0.000000e+00 : bf16
    %24 = vector.broadcast %cst_17 : bf16 to vector<8x128xbf16>
    %25 = arith.maximumf %23, %24 : vector<8x128xbf16>
    %c0_18 = arith.constant 0 : index
    %c0_19 = arith.constant 0 : index
    %26 = vector.load %arg8[%c0_18, %c0_19] : memref<128x128xbf16, #tpu.memory_space<vmem>>, vector<128x128xbf16>
    %cst_20 = arith.constant dense<0.000000e+00> : vector<8x128xf32>
    %27 = tpu.matmul %25, %26, %cst_20 {dimension_numbers = #tpu.dot_dimension_numbers<[1], [0], [0], [1], [0, 0, 1, 1], [], []>} : vector<8x128xbf16>, vector<128x128xbf16>, vector<8x128xf32> -> vector<8x128xf32>
    %c0_21 = arith.constant 0 : index
    %c0_22 = arith.constant 0 : index
    %28 = vector.load %arg9[%c0_21, %c0_22] : memref<1x128xf32, #tpu.memory_space<vmem>>, vector<1x128xf32>
    %29 = vector.broadcast %28 : vector<1x128xf32> to vector<8x128xf32>
    %30 = arith.addf %27, %29 : vector<8x128xf32>
    %31 = arith.truncf %30 : vector<8x128xf32> to vector<8x128xbf16>
    %c0_23 = arith.constant 0 : index
    %c0_24 = arith.constant 0 : index
    %32 = vector.load %arg10[%c0_23, %c0_24] : memref<8x128xbf16, #tpu.memory_space<vmem>>, vector<8x128xbf16>
    tpu.vector_store %arg10[%c0_23, %c0_24], %31 {strides = array<i32>} : memref<8x128xbf16, #tpu.memory_space<vmem>>, vector<8x128xbf16>,
    return
  }
  func.func @transform_0(%arg0: i32) -> (i32, i32) {
    %c0_i32 = arith.constant 0 : i32
    %c0_i32_0 = arith.constant 0 : i32
    return %arg0, %c0_i32 : i32, i32
  }
  func.func @transform_1(%arg0: i32) -> (i32, i32) {
    %c0_i32 = arith.constant 0 : i32
    %c0_i32_0 = arith.constant 0 : i32
    %c0_i32_1 = arith.constant 0 : i32
    return %c0_i32, %c0_i32_0 : i32, i32
  }
  func.func @transform_2(%arg0: i32) -> (i32, i32) {
    %c0_i32 = arith.constant 0 : i32
    %c0_i32_0 = arith.constant 0 : i32
    %c0_i32_1 = arith.constant 0 : i32
    return %c0_i32, %c0_i32_0 : i32, i32
  }
  func.func @transform_3(%arg0: i32) -> (i32, i32) {
    %c0_i32 = arith.constant 0 : i32
    %c0_i32_0 = arith.constant 0 : i32
    %c0_i32_1 = arith.constant 0 : i32
    return %c0_i32, %c0_i32_0 : i32, i32
  }
  func.func @transform_4(%arg0: i32) -> (i32, i32) {
    %c0_i32 = arith.constant 0 : i32
    %c0_i32_0 = arith.constant 0 : i32
    %c0_i32_1 = arith.constant 0 : i32
    return %c0_i32, %c0_i32_0 : i32, i32
  }
  func.func @transform_5(%arg0: i32) -> (i32, i32) {
    %c0_i32 = arith.constant 0 : i32
    %c0_i32_0 = arith.constant 0 : i32
    %c0_i32_1 = arith.constant 0 : i32
    return %c0_i32, %c0_i32_0 : i32, i32
  }
  func.func @transform_6(%arg0: i32) -> (i32, i32) {
    %c0_i32 = arith.constant 0 : i32
    %c0_i32_0 = arith.constant 0 : i32
    %c0_i32_1 = arith.constant 0 : i32
    return %c0_i32, %c0_i32_0 : i32, i32
  }
  func.func @transform_7(%arg0: i32) -> (i32, i32) {
    %c0_i32 = arith.constant 0 : i32
    %c0_i32_0 = arith.constant 0 : i32
    %c0_i32_1 = arith.constant 0 : i32
    return %c0_i32, %c0_i32_0 : i32, i32
  }
  func.func @transform_8(%arg0: i32) -> (i32, i32) {
    %c0_i32 = arith.constant 0 : i32
    %c0_i32_0 = arith.constant 0 : i32
    %c0_i32_1 = arith.constant 0 : i32
    return %c0_i32, %c0_i32_0 : i32, i32
  }
  func.func @transform_9(%arg0: i32) -> (i32, i32) {
    %c0_i32 = arith.constant 0 : i32
    %c0_i32_0 = arith.constant 0 : i32
    return %arg0, %c0_i32 : i32, i32
  }
}

</mosaic_0001>

<llo_original>
// kernel: simple_decoder_forward.1
$region0: #{simple_decoder_forward.1}
  #allocation0 [shape = 'u32[]', space=smem, size = 0x4, offset = 0x4, fixed_abs, tag = 'smem constant byte address 0x4 - core index']
  #allocation1 [shape = 'u32[72,128]{1,0:T(1,128)}', space=vmem, size = 0x9000, scoped, tag = 'internal scratch']
  %s0 = inlined_call_operand.hbm [shape: f32[8,34], index: 0, kind: input, shape index: {}]
  %s1 = inlined_call_operand.hbm [shape: bf16[34,128], index: 1, kind: input, shape index: {}]
  %s2 = inlined_call_operand.hbm [shape: f32[1,128], index: 2, kind: input, shape index: {}]
  %s3 = inlined_call_operand.hbm [shape: bf16[128,512], index: 3, kind: input, shape index: {}]
  %s4 = inlined_call_operand.hbm [shape: f32[1,512], index: 4, kind: input, shape index: {}]
  %s5 = inlined_call_operand.hbm [shape: bf16[512,128], index: 5, kind: input, shape index: {}]
  %s6 = inlined_call_operand.vmem [shape: f32[1,128], index: 6, kind: input, shape index: {}]
  %s7 = inlined_call_operand.hbm [shape: bf16[128,128], index: 7, kind: input, shape index: {}]
  %s8 = inlined_call_operand.vmem [shape: f32[1,128], index: 8, kind: input, shape index: {}]
  %s9 = inlined_call_operand.vmem [shape: bf16[8,128], index: 9, kind: output, shape index: {}]
  %s10 = sld [smem:[#allocation0]]
  $region74: #{simple_decoder_forward.1} parent=0
    _
  %s12 = ssub.s32 1, %s10
  %s13 = scalar_select 0, %s12, %s10
  $region1: #{simple_decoder_forward.1} parent=0
    #allocation2 [shape = 'u8[4096]{0}', space=vmem, size = 0x1000, scoped, tag = 'input window, operand 0, single buffered']
    #allocation3 [shape = 's32[1]{0}', space=sflag, size = 0x4, scoped, tag = 'scoped memory for simple_decoder_forward.1']
    #allocation4 [shape = 'u8[10240]{0}', space=vmem, size = 0x2800, scoped, tag = 'input window, operand 1, single buffered']
    #allocation5 [shape = 's32[1]{0}', space=sflag, size = 0x4, scoped, tag = 'scoped memory for simple_decoder_forward.1']
    #allocation6 [shape = 'u8[512]{0}', space=vmem, size = 0x400, scoped, tag = 'input window, operand 2, single buffered']
    #allocation7 [shape = 'u8[131072]{0}', space=vmem, size = 0x20000, scoped, tag = 'input window, operand 3, single buffered']
    #allocation8 [shape = 's32[1]{0}', space=sflag, size = 0x4, scoped, tag = 'scoped memory for simple_decoder_forward.1']
    #allocation9 [shape = 'u8[2048]{0}', space=vmem, size = 0x800, scoped, tag = 'input window, operand 4, single buffered']
    #allocation10 [shape = 'u8[131072]{0}', space=vmem, size = 0x20000, scoped, tag = 'input window, operand 5, single buffered']
    #allocation11 [shape = 's32[1]{0}', space=sflag, size = 0x4, scoped, tag = 'scoped memory for simple_decoder_forward.1']
    #allocation12 [shape = 'u8[32768]{0}', space=vmem, size = 0x8000, scoped, tag = 'input window, operand 7, single buffered']
    %14 = vsyncpa [#allocation3], 0
    %15 = vsyncpa [#allocation5], 0
    %16 = vsyncpa [#allocation8], 0
    %17 = vsyncpa [#allocation11], 0
    // Predicated region
    $region2: #{simple_decoder_forward.1} parent=1 // pred_check
      _
    $region3: #{simple_decoder_forward.1} parent=1 // pred_check_branch
      %19 = sbr.rel (0) target = $region5
    $region4: #{simple_decoder_forward.1} parent=1 // pred_region
      %21 = vsyncadd [#allocation3], 0
      %s23 = sshll.u32 %s0, 4
      %s24 = int_to_ptr.hbm [resolvable:$true] %s23
      %s25 = sshll.u32 [#allocation2], 4
      %s26 = int_to_ptr.vmem [resolvable:$true] %s25
      %28 = dma.hbm_to_vmem [thread:$0]  %s24, 128, %s26, [#allocation3]
    $region5: #{simple_decoder_forward.1} parent=1 // pred_fallthru
      _
    // Predicated region
    $region6: #{simple_decoder_forward.1} parent=1 // pred_check
      _
    $region7: #{simple_decoder_forward.1} parent=1 // pred_check_branch
      %30 = sbr.rel (0) target = $region9
    $region8: #{simple_decoder_forward.1} parent=1 // pred_region
      %32 = vsyncadd [#allocation5], 0
      %s33 = sshll.u32 %s1, 4
      %s34 = int_to_ptr.hbm [resolvable:$true] %s33
      %s35 = sshll.u32 [#allocation4], 4
      %s36 = int_to_ptr.vmem [resolvable:$true] %s35
      %41 = dma.hbm_to_vmem [thread:$0]  %s34, 320, %s36, [#allocation5], 64, 64, 4
    $region9: #{simple_decoder_forward.1} parent=1 // pred_fallthru
      _
    // Predicated region
    $region10: #{simple_decoder_forward.1} parent=1 // pred_check
      _
    $region11: #{simple_decoder_forward.1} parent=1 // pred_check_branch
      %43 = sbr.rel (0) target = $region13
    $region12: #{simple_decoder_forward.1} parent=1 // pred_region
      %45 = vsyncadd [#allocation5], 0
      %s47 = sshll.u32 %s2, 4
      %s48 = int_to_ptr.hbm [resolvable:$true] %s47
      %s49 = sshll.u32 [#allocation6], 4
      %s50 = int_to_ptr.vmem [resolvable:$true] %s49
      %52 = dma.hbm_to_vmem [thread:$0]  %s48, 16, %s50, [#allocation5]
    $region13: #{simple_decoder_forward.1} parent=1 // pred_fallthru
      _
    // Predicated region
    $region14: #{simple_decoder_forward.1} parent=1 // pred_check
      _
    $region15: #{simple_decoder_forward.1} parent=1 // pred_check_branch
      %54 = sbr.rel (0) target = $region17
    $region16: #{simple_decoder_forward.1} parent=1 // pred_region
      %56 = vsyncadd [#allocation8], 0
      %s57 = sshll.u32 %s3, 4
      %s58 = int_to_ptr.hbm [resolvable:$true] %s57
      %s59 = sshll.u32 [#allocation7], 4
      %s60 = int_to_ptr.vmem [resolvable:$true] %s59
      %65 = dma.hbm_to_vmem [thread:$0]  %s58, 4096, %s60, [#allocation8], 256, 256, 16
    $region17: #{simple_decoder_forward.1} parent=1 // pred_fallthru
      _
    // Predicated region
    $region18: #{simple_decoder_forward.1} parent=1 // pred_check
      _
    $region19: #{simple_decoder_forward.1} parent=1 // pred_check_branch
      %67 = sbr.rel (0) target = $region21
    $region20: #{simple_decoder_forward.1} parent=1 // pred_region
      %69 = vsyncadd [#allocation8], 0
      %s71 = sshll.u32 %s4, 4
      %s72 = int_to_ptr.hbm [resolvable:$true] %s71
      %s73 = sshll.u32 [#allocation9], 4
      %s74 = int_to_ptr.vmem [resolvable:$true] %s73
      %76 = dma.hbm_to_vmem [thread:$0]  %s72, 64, %s74, [#allocation8]
    $region21: #{simple_decoder_forward.1} parent=1 // pred_fallthru
      _
    // Predicated region
    $region22: #{simple_decoder_forward.1} parent=1 // pred_check
      _
    $region23: #{simple_decoder_forward.1} parent=1 // pred_check_branch
      %78 = sbr.rel (0) target = $region25
    $region24: #{simple_decoder_forward.1} parent=1 // pred_region
      %80 = vsyncadd [#allocation11], 0
      %s81 = sshll.u32 %s5, 4
      %s82 = int_to_ptr.hbm [resolvable:$true] %s81
      %s83 = sshll.u32 [#allocation10], 4
      %s84 = int_to_ptr.vmem [resolvable:$true] %s83
      %89 = dma.hbm_to_vmem [thread:$0]  %s82, 4096, %s84, [#allocation11], 64, 64, 4
    $region25: #{simple_decoder_forward.1} parent=1 // pred_fallthru
      _
    // Predicated region
    $region26: #{simple_decoder_forward.1} parent=1 // pred_check
      _
    $region27: #{simple_decoder_forward.1} parent=1 // pred_check_branch
      %91 = sbr.rel (0) target = $region29
    $region28: #{simple_decoder_forward.1} parent=1 // pred_region
      _
    $region29: #{simple_decoder_forward.1} parent=1 // pred_fallthru
      _
    // Predicated region
    $region30: #{simple_decoder_forward.1} parent=1 // pred_check
      _
    $region31: #{simple_decoder_forward.1} parent=1 // pred_check_branch
      %93 = sbr.rel (0) target = $region33
    $region32: #{simple_decoder_forward.1} parent=1 // pred_region
      %95 = vsyncadd [#allocation11], 0
      %s96 = sshll.u32 %s7, 4
      %s97 = int_to_ptr.hbm [resolvable:$true] %s96
      %s98 = sshll.u32 [#allocation12], 4
      %s99 = int_to_ptr.vmem [resolvable:$true] %s98
      %104 = dma.hbm_to_vmem [thread:$0]  %s97, 1024, %s99, [#allocation11], 64, 64, 4
    $region33: #{simple_decoder_forward.1} parent=1 // pred_fallthru
      _
    // Predicated region
    $region34: #{simple_decoder_forward.1} parent=1 // pred_check
      _
    $region35: #{simple_decoder_forward.1} parent=1 // pred_check_branch
      %106 = sbr.rel (0) target = $region37
    $region36: #{simple_decoder_forward.1} parent=1 // pred_region
      _
    $region37: #{simple_decoder_forward.1} parent=1 // pred_fallthru
      _
    // Predicated region
    $region38: #{simple_decoder_forward.1} parent=1 // pred_check
      _
    $region39: #{simple_decoder_forward.1} parent=1 // pred_check_branch
      %108 = sbr.rel (0) target = $region41
    $region40: #{simple_decoder_forward.1} parent=1 // pred_region
      %110 = dma.done [#allocation3], 128
    $region41: #{simple_decoder_forward.1} parent=1 // pred_fallthru
      _
    // Predicated region
    $region42: #{simple_decoder_forward.1} parent=1 // pred_check
      _
    $region43: #{simple_decoder_forward.1} parent=1 // pred_check_branch
      %112 = sbr.rel (0) target = $region45
    $region44: #{simple_decoder_forward.1} parent=1 // pred_region
      %114 = dma.done [#allocation5], 320
    $region45: #{simple_decoder_forward.1} parent=1 // pred_fallthru
      _
    // Predicated region
    $region46: #{simple_decoder_forward.1} parent=1 // pred_check
      _
    $region47: #{simple_decoder_forward.1} parent=1 // pred_check_branch
      %116 = sbr.rel (0) target = $region49
    $region48: #{simple_decoder_forward.1} parent=1 // pred_region
      %118 = dma.done [#allocation5], 16
    $region49: #{simple_decoder_forward.1} parent=1 // pred_fallthru
      _
    // Predicated region
    $region50: #{simple_decoder_forward.1} parent=1 // pred_check
      _
    $region51: #{simple_decoder_forward.1} parent=1 // pred_check_branch
      %120 = sbr.rel (0) target = $region53
    $region52: #{simple_decoder_forward.1} parent=1 // pred_region
      %122 = dma.done [#allocation8], 4096
    $region53: #{simple_decoder_forward.1} parent=1 // pred_fallthru
      _
    // Predicated region
    $region54: #{simple_decoder_forward.1} parent=1 // pred_check
      _
    $region55: #{simple_decoder_forward.1} parent=1 // pred_check_branch
      %124 = sbr.rel (0) target = $region57
    $region56: #{simple_decoder_forward.1} parent=1 // pred_region
      %126 = dma.done [#allocation8], 64
    $region57: #{simple_decoder_forward.1} parent=1 // pred_fallthru
      _
    // Predicated region
    $region58: #{simple_decoder_forward.1} parent=1 // pred_check
      _
    $region59: #{simple_decoder_forward.1} parent=1 // pred_check_branch
      %128 = sbr.rel (0) target = $region61
    $region60: #{simple_decoder_forward.1} parent=1 // pred_region
      %130 = dma.done [#allocation11], 4096
    $region61: #{simple_decoder_forward.1} parent=1 // pred_fallthru
      _
    // Predicated region
    $region62: #{simple_decoder_forward.1} parent=1 // pred_check
      _
    $region63: #{simple_decoder_forward.1} parent=1 // pred_check_branch
      %132 = sbr.rel (0) target = $region65
    $region64: #{simple_decoder_forward.1} parent=1 // pred_region
      %134 = dma.done [#allocation11], 1024
    $region65: #{simple_decoder_forward.1} parent=1 // pred_fallthru
      _
    %v136 = vld [vmem:[#allocation2] sm:$0xff]
    %v137 = vpack.c.bf16 %v136, %v136
    %v138 = vld [vmem:[#allocation4] sm:$0xf]
    %v139 = vld [vmem:[#allocation4 + $0x4] sm:$0xf]
    %v140 = vld [vmem:[#allocation4 + $0x8] sm:$0xf]
    %v141 = vld [vmem:[#allocation4 + $0xc] sm:$0xf]
    %v142 = vld [vmem:[#allocation4 + $0x10] sm:$0x1]
    %v143 = vld [vmem:[#allocation6] sm:$0x1]
    %v145 = vperm.slane %v143, 0
    %v152 = vunpack.c.l.b16 %v138
    %v153 = vunpack.c.l.b16 %v139
    %v154 = vunpack.c.l.b16 %v140
    %v155 = vunpack.c.l.b16 %v141
    %v156 = vunpack.c.l.b16 %v142
    %v157 = vpack.c.b16 %v153, %v152
    %v158 = vpack.c.b16 %v155, %v154
    %v159 = vpack.c.b16 %v156, %v156
    %vm162 = vcmask 277504
    %v164 = vsel %vm162, %v137, 0
    %vm166 = vcmask 1040384
    %v168 = vsel %vm166, %v159, 0
    %170 = vmatpush.bf16.msra.mxu0 0
    %171 = vmatpush.bf16.msra.mxu0 0
    %172 = vmatpush.bf16.msra.mxu0 0
    %173 = vmatpush.bf16.msra.mxu0 0
    %174 = vmatpush.bf16.msra.mxu0 0
    %175 = vmatpush.bf16.msra.mxu0 %v168
    %176 = vmatpush.bf16.msra.mxu0 %v158
    %177 = vmatpush.bf16.msra.mxu0 %v157
    %178 = vmatmul.bf16.gmra.mxu0 %v164
    %v179 = vpop.f32.mrf.mxu0
    %v180 = vadd.f32 %v145, %v179
    %v181 = vpop.f32.mrf.mxu0
    %182 = vdwg.mxu0
    %v183 = vpack.c.bf16 %v180, %v180
    %v184 = vunpack.c.l.bf16 %v183
    %v185 = vmax.f32 %v184, 0.0
    %v186 = vpack.c.bf16 %v185, %v185
    %v187 = vld [vmem:[#allocation7] sm:$0xff]
    %v188 = vld [vmem:[#allocation7 + $0x8] sm:$0xff]
    %v189 = vld [vmem:[#allocation7 + $0x10] sm:$0xff]
    %v190 = vld [vmem:[#allocation7 + $0x18] sm:$0xff]
    %v191 = vld [vmem:[#allocation7 + $0x20] sm:$0xff]
    %v192 = vld [vmem:[#allocation7 + $0x28] sm:$0xff]
    %v193 = vld [vmem:[#allocation7 + $0x30] sm:$0xff]
    %v194 = vld [vmem:[#allocation7 + $0x38] sm:$0xff]
    %v195 = vld [vmem:[#allocation7 + $0x40] sm:$0xff]
    %v196 = vld [vmem:[#allocation7 + $0x48] sm:$0xff]
    %v197 = vld [vmem:[#allocation7 + $0x50] sm:$0xff]
    %v198 = vld [vmem:[#allocation7 + $0x58] sm:$0xff]
    %v199 = vld [vmem:[#allocation7 + $0x60] sm:$0xff]
    %v200 = vld [vmem:[#allocation7 + $0x68] sm:$0xff]
    %v201 = vld [vmem:[#allocation7 + $0x70] sm:$0xff]
    %v202 = vld [vmem:[#allocation7 + $0x78] sm:$0xff]
    %v203 = vld [vmem:[#allocation7 + $0x80] sm:$0xff]
    %v204 = vld [vmem:[#allocation7 + $0x88] sm:$0xff]
    %v205 = vld [vmem:[#allocation7 + $0x90] sm:$0xff]
    %v206 = vld [vmem:[#allocation7 + $0x98] sm:$0xff]
    %v207 = vld [vmem:[#allocation7 + $0xa0] sm:$0xff]
    %v208 = vld [vmem:[#allocation7 + $0xa8] sm:$0xff]
    %v209 = vld [vmem:[#allocation7 + $0xb0] sm:$0xff]
    %v210 = vld [vmem:[#allocation7 + $0xb8] sm:$0xff]
    %v211 = vld [vmem:[#allocation7 + $0xc0] sm:$0xff]
    %v212 = vld [vmem:[#allocation7 + $0xc8] sm:$0xff]
    %v213 = vld [vmem:[#allocation7 + $0xd0] sm:$0xff]
    %v214 = vld [vmem:[#allocation7 + $0xd8] sm:$0xff]
    %v215 = vld [vmem:[#allocation7 + $0xe0] sm:$0xff]
    %v216 = vld [vmem:[#allocation7 + $0xe8] sm:$0xff]
    %v217 = vld [vmem:[#allocation7 + $0xf0] sm:$0xff]
    %v218 = vld [vmem:[#allocation7 + $0xf8] sm:$0xff]
    %v219 = vld [vmem:[#allocation9] sm:$0xf]
    %v221 = vperm.slane %v219, 0
    %v222 = vperm.slane %v219, 1
    %v223 = vperm.slane %v219, 2
    %v224 = vperm.slane %v219, 3
    %v261 = vunpack.c.l.b16 %v187
    %v262 = vunpack.c.h.b16 %v187
    %v263 = vunpack.c.l.b16 %v188
    %v264 = vunpack.c.h.b16 %v188
    %v265 = vunpack.c.l.b16 %v189
    %v266 = vunpack.c.h.b16 %v189
    %v267 = vunpack.c.l.b16 %v190
    %v268 = vunpack.c.h.b16 %v190
    %v269 = vunpack.c.l.b16 %v191
    %v270 = vunpack.c.h.b16 %v191
    %v271 = vunpack.c.l.b16 %v192
    %v272 = vunpack.c.h.b16 %v192
    %v273 = vunpack.c.l.b16 %v193
    %v274 = vunpack.c.h.b16 %v193
    %v275 = vunpack.c.l.b16 %v194
    %v276 = vunpack.c.h.b16 %v194
    %v277 = vunpack.c.l.b16 %v195
    %v278 = vunpack.c.h.b16 %v195
    %v279 = vunpack.c.l.b16 %v196
    %v280 = vunpack.c.h.b16 %v196
    %v281 = vunpack.c.l.b16 %v197
    %v282 = vunpack.c.h.b16 %v197
    %v283 = vunpack.c.l.b16 %v198
    %v284 = vunpack.c.h.b16 %v198
    %v285 = vunpack.c.l.b16 %v199
    %v286 = vunpack.c.h.b16 %v199
    %v287 = vunpack.c.l.b16 %v200
    %v288 = vunpack.c.h.b16 %v200
    %v289 = vunpack.c.l.b16 %v201
    %v290 = vunpack.c.h.b16 %v201
    %v291 = vunpack.c.l.b16 %v202
    %v292 = vunpack.c.h.b16 %v202
    %v293 = vunpack.c.l.b16 %v203
    %v294 = vunpack.c.h.b16 %v203
    %v295 = vunpack.c.l.b16 %v204
    %v296 = vunpack.c.h.b16 %v204
    %v297 = vunpack.c.l.b16 %v205
    %v298 = vunpack.c.h.b16 %v205
    %v299 = vunpack.c.l.b16 %v206
    %v300 = vunpack.c.h.b16 %v206
    %v301 = vunpack.c.l.b16 %v207
    %v302 = vunpack.c.h.b16 %v207
    %v303 = vunpack.c.l.b16 %v208
    %v304 = vunpack.c.h.b16 %v208
    %v305 = vunpack.c.l.b16 %v209
    %v306 = vunpack.c.h.b16 %v209
    %v307 = vunpack.c.l.b16 %v210
    %v308 = vunpack.c.h.b16 %v210
    %v309 = vunpack.c.l.b16 %v211
    %v310 = vunpack.c.h.b16 %v211
    %v311 = vunpack.c.l.b16 %v212
    %v312 = vunpack.c.h.b16 %v212
    %v313 = vunpack.c.l.b16 %v213
    %v314 = vunpack.c.h.b16 %v213
    %v315 = vunpack.c.l.b16 %v214
    %v316 = vunpack.c.h.b16 %v214
    %v317 = vunpack.c.l.b16 %v215
    %v318 = vunpack.c.h.b16 %v215
    %v319 = vunpack.c.l.b16 %v216
    %v320 = vunpack.c.h.b16 %v216
    %v321 = vunpack.c.l.b16 %v217
    %v322 = vunpack.c.h.b16 %v217
    %v323 = vunpack.c.l.b16 %v218
    %v324 = vunpack.c.h.b16 %v218
    %v325 = vpack.c.b16 %v265, %v261
    %v326 = vpack.c.b16 %v266, %v262
    %v327 = vpack.c.b16 %v267, %v263
    %v328 = vpack.c.b16 %v268, %v264
    %v329 = vpack.c.b16 %v273, %v269
    %v330 = vpack.c.b16 %v274, %v270
    %v331 = vpack.c.b16 %v275, %v271
    %v332 = vpack.c.b16 %v276, %v272
    %v333 = vpack.c.b16 %v281, %v277
    %v334 = vpack.c.b16 %v282, %v278
    %v335 = vpack.c.b16 %v283, %v279
    %v336 = vpack.c.b16 %v284, %v280
    %v337 = vpack.c.b16 %v289, %v285
    %v338 = vpack.c.b16 %v290, %v286
    %v339 = vpack.c.b16 %v291, %v287
    %v340 = vpack.c.b16 %v292, %v288
    %v341 = vpack.c.b16 %v297, %v293
    %v342 = vpack.c.b16 %v298, %v294
    %v343 = vpack.c.b16 %v299, %v295
    %v344 = vpack.c.b16 %v300, %v296
    %v345 = vpack.c.b16 %v305, %v301
    %v346 = vpack.c.b16 %v306, %v302
    %v347 = vpack.c.b16 %v307, %v303
    %v348 = vpack.c.b16 %v308, %v304
    %v349 = vpack.c.b16 %v313, %v309
    %v350 = vpack.c.b16 %v314, %v310
    %v351 = vpack.c.b16 %v315, %v311
    %v352 = vpack.c.b16 %v316, %v312
    %v353 = vpack.c.b16 %v321, %v317
    %v354 = vpack.c.b16 %v322, %v318
    %v355 = vpack.c.b16 %v323, %v319
    %v356 = vpack.c.b16 %v324, %v320
    %389 = vmatpush.bf16.msra.mxu0 %v353
    %390 = vmatpush.bf16.msra.mxu0 %v349
    %391 = vmatpush.bf16.msra.mxu0 %v345
    %392 = vmatpush.bf16.msra.mxu0 %v341
    %393 = vmatpush.bf16.msra.mxu0 %v337
    %394 = vmatpush.bf16.msra.mxu0 %v333
    %395 = vmatpush.bf16.msra.mxu0 %v329
    %396 = vmatpush.bf16.msra.mxu0 %v325
    %397 = vmatmul.bf16.gmra.mxu0 %v186
    %v398 = vpop.f32.mrf.mxu0
    %v399 = vadd.f32 %v221, %v398
    %v400 = vpop.f32.mrf.mxu0
    %401 = vdwg.mxu0
    %402 = vmatpush.bf16.msra.mxu0 %v354
    %403 = vmatpush.bf16.msra.mxu0 %v350
    %404 = vmatpush.bf16.msra.mxu0 %v346
    %405 = vmatpush.bf16.msra.mxu0 %v342
    %406 = vmatpush.bf16.msra.mxu0 %v338
    %407 = vmatpush.bf16.msra.mxu0 %v334
    %408 = vmatpush.bf16.msra.mxu0 %v330
    %409 = vmatpush.bf16.msra.mxu0 %v326
    %410 = vmatmul.bf16.gmra.mxu0 %v186
    %v411 = vpop.f32.mrf.mxu0
    %v412 = vadd.f32 %v222, %v411
    %v413 = vpop.f32.mrf.mxu0
    %414 = vdwg.mxu0
    %415 = vmatpush.bf16.msra.mxu0 %v355
    %416 = vmatpush.bf16.msra.mxu0 %v351
    %417 = vmatpush.bf16.msra.mxu0 %v347
    %418 = vmatpush.bf16.msra.mxu0 %v343
    %419 = vmatpush.bf16.msra.mxu0 %v339
    %420 = vmatpush.bf16.msra.mxu0 %v335
    %421 = vmatpush.bf16.msra.mxu0 %v331
    %422 = vmatpush.bf16.msra.mxu0 %v327
    %423 = vmatmul.bf16.gmra.mxu0 %v186
    %v424 = vpop.f32.mrf.mxu0
    %v425 = vadd.f32 %v223, %v424
    %v426 = vpop.f32.mrf.mxu0
    %427 = vdwg.mxu0
    %428 = vmatpush.bf16.msra.mxu0 %v356
    %429 = vmatpush.bf16.msra.mxu0 %v352
    %430 = vmatpush.bf16.msra.mxu0 %v348
    %431 = vmatpush.bf16.msra.mxu0 %v344
    %432 = vmatpush.bf16.msra.mxu0 %v340
    %433 = vmatpush.bf16.msra.mxu0 %v336
    %434 = vmatpush.bf16.msra.mxu0 %v332
    %435 = vmatpush.bf16.msra.mxu0 %v328
    %436 = vmatmul.bf16.gmra.mxu0 %v186
    %v437 = vpop.f32.mrf.mxu0
    %v438 = vadd.f32 %v224, %v437
    %v439 = vpop.f32.mrf.mxu0
    %440 = vdwg.mxu0
    %v441 = vpack.c.bf16 %v412, %v399
    %v442 = vpack.c.bf16 %v438, %v425
    %v443 = vunpack.c.l.bf16 %v441
    %v444 = vunpack.c.h.bf16 %v441
    %v445 = vunpack.c.l.bf16 %v442
    %v446 = vunpack.c.h.bf16 %v442
    %v447 = vmax.f32 %v443, 0.0
    %v448 = vmax.f32 %v444, 0.0
    %v449 = vmax.f32 %v445, 0.0
    %v450 = vmax.f32 %v446, 0.0
    %v451 = vpack.c.bf16 %v447, %v447
    %v452 = vpack.c.bf16 %v448, %v448
    %v453 = vpack.c.bf16 %v449, %v449
    %v454 = vpack.c.bf16 %v450, %v450
    %v455 = vld [vmem:[#allocation10] sm:$0xf]
    %v456 = vld [vmem:[#allocation10 + $0x4] sm:$0xf]
    %v457 = vld [vmem:[#allocation10 + $0x8] sm:$0xf]
    %v458 = vld [vmem:[#allocation10 + $0xc] sm:$0xf]
    %v459 = vld [vmem:[#allocation10 + $0x10] sm:$0xf]
    %v460 = vld [vmem:[#allocation10 + $0x14] sm:$0xf]
    %v461 = vld [vmem:[#allocation10 + $0x18] sm:$0xf]
    %v462 = vld [vmem:[#allocation10 + $0x1c] sm:$0xf]
    %v463 = vld [vmem:[#allocation10 + $0x20] sm:$0xf]
    %v464 = vld [vmem:[#allocation10 + $0x24] sm:$0xf]
    %v465 = vld [vmem:[#allocation10 + $0x28] sm:$0xf]
    %v466 = vld [vmem:[#allocation10 + $0x2c] sm:$0xf]
    %v467 = vld [vmem:[#allocation10 + $0x30] sm:$0xf]
    %v468 = vld [vmem:[#allocation10 + $0x34] sm:$0xf]
    %v469 = vld [vmem:[#allocation10 + $0x38] sm:$0xf]
    %v470 = vld [vmem:[#allocation10 + $0x3c] sm:$0xf]
    %v471 = vld [vmem:[#allocation10 + $0x40] sm:$0xf]
    %v472 = vld [vmem:[#allocation10 + $0x44] sm:$0xf]
    %v473 = vld [vmem:[#allocation10 + $0x48] sm:$0xf]
    %v474 = vld [vmem:[#allocation10 + $0x4c] sm:$0xf]
    %v475 = vld [vmem:[#allocation10 + $0x50] sm:$0xf]
    %v476 = vld [vmem:[#allocation10 + $0x54] sm:$0xf]
    %v477 = vld [vmem:[#allocation10 + $0x58] sm:$0xf]
    %v478 = vld [vmem:[#allocation10 + $0x5c] sm:$0xf]
    %v479 = vld [vmem:[#allocation10 + $0x60] sm:$0xf]
    %v480 = vld [vmem:[#allocation10 + $0x64] sm:$0xf]
    %v481 = vld [vmem:[#allocation10 + $0x68] sm:$0xf]
    %v482 = vld [vmem:[#allocation10 + $0x6c] sm:$0xf]
    %v483 = vld [vmem:[#allocation10 + $0x70] sm:$0xf]
    %v484 = vld [vmem:[#allocation10 + $0x74] sm:$0xf]
    %v485 = vld [vmem:[#allocation10 + $0x78] sm:$0xf]
    %v486 = vld [vmem:[#allocation10 + $0x7c] sm:$0xf]
    %v487 = vld [vmem:[#allocation10 + $0x80] sm:$0xf]
    %v488 = vld [vmem:[#allocation10 + $0x84] sm:$0xf]
    %v489 = vld [vmem:[#allocation10 + $0x88] sm:$0xf]
    %v490 = vld [vmem:[#allocation10 + $0x8c] sm:$0xf]
    %v491 = vld [vmem:[#allocation10 + $0x90] sm:$0xf]
    %v492 = vld [vmem:[#allocation10 + $0x94] sm:$0xf]
    %v493 = vld [vmem:[#allocation10 + $0x98] sm:$0xf]
    %v494 = vld [vmem:[#allocation10 + $0x9c] sm:$0xf]
    %v495 = vld [vmem:[#allocation10 + $0xa0] sm:$0xf]
    %v496 = vld [vmem:[#allocation10 + $0xa4] sm:$0xf]
    %v497 = vld [vmem:[#allocation10 + $0xa8] sm:$0xf]
    %v498 = vld [vmem:[#allocation10 + $0xac] sm:$0xf]
    %v499 = vld [vmem:[#allocation10 + $0xb0] sm:$0xf]
    %v500 = vld [vmem:[#allocation10 + $0xb4] sm:$0xf]
    %v501 = vld [vmem:[#allocation10 + $0xb8] sm:$0xf]
    %v502 = vld [vmem:[#allocation10 + $0xbc] sm:$0xf]
    %v503 = vld [vmem:[#allocation10 + $0xc0] sm:$0xf]
    %v504 = vld [vmem:[#allocation10 + $0xc4] sm:$0xf]
    %v505 = vld [vmem:[#allocation10 + $0xc8] sm:$0xf]
    %v506 = vld [vmem:[#allocation10 + $0xcc] sm:$0xf]
    %v507 = vld [vmem:[#allocation10 + $0xd0] sm:$0xf]
    %v508 = vld [vmem:[#allocation10 + $0xd4] sm:$0xf]
    %v509 = vld [vmem:[#allocation10 + $0xd8] sm:$0xf]
    %v510 = vld [vmem:[#allocation10 + $0xdc] sm:$0xf]
    %v511 = vld [vmem:[#allocation10 + $0xe0] sm:$0xf]
    %v512 = vld [vmem:[#allocation10 + $0xe4] sm:$0xf]
    %v513 = vld [vmem:[#allocation10 + $0xe8] sm:$0xf]
    %v514 = vld [vmem:[#allocation10 + $0xec] sm:$0xf]
    %v515 = vld [vmem:[#allocation10 + $0xf0] sm:$0xf]
    %v516 = vld [vmem:[#allocation10 + $0xf4] sm:$0xf]
    %v517 = vld [vmem:[#allocation10 + $0xf8] sm:$0xf]
    %v518 = vld [vmem:[#allocation10 + $0xfc] sm:$0xf]
    %v519 = vld [vmem:[%s6] sm:$0x1]
    %v521 = vperm.slane %v519, 0
    %v587 = vunpack.c.l.b16 %v455
    %v588 = vunpack.c.l.b16 %v456
    %v589 = vunpack.c.l.b16 %v457
    %v590 = vunpack.c.l.b16 %v458
    %v591 = vunpack.c.l.b16 %v459
    %v592 = vunpack.c.l.b16 %v460
    %v593 = vunpack.c.l.b16 %v461
    %v594 = vunpack.c.l.b16 %v462
    %v595 = vunpack.c.l.b16 %v463
    %v596 = vunpack.c.l.b16 %v464
    %v597 = vunpack.c.l.b16 %v465
    %v598 = vunpack.c.l.b16 %v466
    %v599 = vunpack.c.l.b16 %v467
    %v600 = vunpack.c.l.b16 %v468
    %v601 = vunpack.c.l.b16 %v469
    %v602 = vunpack.c.l.b16 %v470
    %v603 = vunpack.c.l.b16 %v471
    %v604 = vunpack.c.l.b16 %v472
    %v605 = vunpack.c.l.b16 %v473
    %v606 = vunpack.c.l.b16 %v474
    %v607 = vunpack.c.l.b16 %v475
    %v608 = vunpack.c.l.b16 %v476
    %v609 = vunpack.c.l.b16 %v477
    %v610 = vunpack.c.l.b16 %v478
    %v611 = vunpack.c.l.b16 %v479
    %v612 = vunpack.c.l.b16 %v480
    %v613 = vunpack.c.l.b16 %v481
    %v614 = vunpack.c.l.b16 %v482
    %v615 = vunpack.c.l.b16 %v483
    %v616 = vunpack.c.l.b16 %v484
    %v617 = vunpack.c.l.b16 %v485
    %v618 = vunpack.c.l.b16 %v486
    %v619 = vunpack.c.l.b16 %v487
    %v620 = vunpack.c.l.b16 %v488
    %v621 = vunpack.c.l.b16 %v489
    %v622 = vunpack.c.l.b16 %v490
    %v623 = vunpack.c.l.b16 %v491
    %v624 = vunpack.c.l.b16 %v492
    %v625 = vunpack.c.l.b16 %v493
    %v626 = vunpack.c.l.b16 %v494
    %v627 = vunpack.c.l.b16 %v495
    %v628 = vunpack.c.l.b16 %v496
    %v629 = vunpack.c.l.b16 %v497
    %v630 = vunpack.c.l.b16 %v498
    %v631 = vunpack.c.l.b16 %v499
    %v632 = vunpack.c.l.b16 %v500
    %v633 = vunpack.c.l.b16 %v501
    %v634 = vunpack.c.l.b16 %v502
    %v635 = vunpack.c.l.b16 %v503
    %v636 = vunpack.c.l.b16 %v504
    %v637 = vunpack.c.l.b16 %v505
    %v638 = vunpack.c.l.b16 %v506
    %v639 = vunpack.c.l.b16 %v507
    %v640 = vunpack.c.l.b16 %v508
    %v641 = vunpack.c.l.b16 %v509
    %v642 = vunpack.c.l.b16 %v510
    %v643 = vunpack.c.l.b16 %v511
    %v644 = vunpack.c.l.b16 %v512
    %v645 = vunpack.c.l.b16 %v513
    %v646 = vunpack.c.l.b16 %v514
    %v647 = vunpack.c.l.b16 %v515
    %v648 = vunpack.c.l.b16 %v516
    %v649 = vunpack.c.l.b16 %v517
    %v650 = vunpack.c.l.b16 %v518
    %v651 = vpack.c.b16 %v588, %v587
    %v652 = vpack.c.b16 %v590, %v589
    %v653 = vpack.c.b16 %v592, %v591
    %v654 = vpack.c.b16 %v594, %v593
    %v655 = vpack.c.b16 %v596, %v595
    %v656 = vpack.c.b16 %v598, %v597
    %v657 = vpack.c.b16 %v600, %v599
    %v658 = vpack.c.b16 %v602, %v601
    %v659 = vpack.c.b16 %v604, %v603
    %v660 = vpack.c.b16 %v606, %v605
    %v661 = vpack.c.b16 %v608, %v607
    %v662 = vpack.c.b16 %v610, %v609
    %v663 = vpack.c.b16 %v612, %v611
    %v664 = vpack.c.b16 %v614, %v613
    %v665 = vpack.c.b16 %v616, %v615
    %v666 = vpack.c.b16 %v618, %v617
    %v667 = vpack.c.b16 %v620, %v619
    %v668 = vpack.c.b16 %v622, %v621
    %v669 = vpack.c.b16 %v624, %v623
    %v670 = vpack.c.b16 %v626, %v625
    %v671 = vpack.c.b16 %v628, %v627
    %v672 = vpack.c.b16 %v630, %v629
    %v673 = vpack.c.b16 %v632, %v631
    %v674 = vpack.c.b16 %v634, %v633
    %v675 = vpack.c.b16 %v636, %v635
    %v676 = vpack.c.b16 %v638, %v637
    %v677 = vpack.c.b16 %v640, %v639
    %v678 = vpack.c.b16 %v642, %v641
    %v679 = vpack.c.b16 %v644, %v643
    %v680 = vpack.c.b16 %v646, %v645
    %v681 = vpack.c.b16 %v648, %v647
    %v682 = vpack.c.b16 %v650, %v649
    %715 = vmatpush.bf16.msra.mxu0 %v658
    %716 = vmatpush.bf16.msra.mxu0 %v657
    %717 = vmatpush.bf16.msra.mxu0 %v656
    %718 = vmatpush.bf16.msra.mxu0 %v655
    %719 = vmatpush.bf16.msra.mxu0 %v654
    %720 = vmatpush.bf16.msra.mxu0 %v653
    %721 = vmatpush.bf16.msra.mxu0 %v652
    %722 = vmatpush.bf16.msra.mxu0 %v651
    %723 = vmatmul.bf16.gmra.mxu0 %v451
    %v724 = vpop.f32.mrf.mxu0
    %v725 = vadd.f32 %v521, %v724
    %v726 = vpop.f32.mrf.mxu0
    %727 = vdwg.mxu0
    %728 = vmatpush.bf16.msra.mxu0 %v666
    %729 = vmatpush.bf16.msra.mxu0 %v665
    %730 = vmatpush.bf16.msra.mxu0 %v664
    %731 = vmatpush.bf16.msra.mxu0 %v663
    %732 = vmatpush.bf16.msra.mxu0 %v662
    %733 = vmatpush.bf16.msra.mxu0 %v661
    %734 = vmatpush.bf16.msra.mxu0 %v660
    %735 = vmatpush.bf16.msra.mxu0 %v659
    %736 = vmatmul.bf16.gmra.mxu0 %v452
    %v737 = vpop.f32.mrf.mxu0
    %v738 = vadd.f32 %v725, %v737
    %v739 = vpop.f32.mrf.mxu0
    %740 = vdwg.mxu0
    %741 = vmatpush.bf16.msra.mxu0 %v674
    %742 = vmatpush.bf16.msra.mxu0 %v673
    %743 = vmatpush.bf16.msra.mxu0 %v672
    %744 = vmatpush.bf16.msra.mxu0 %v671
    %745 = vmatpush.bf16.msra.mxu0 %v670
    %746 = vmatpush.bf16.msra.mxu0 %v669
    %747 = vmatpush.bf16.msra.mxu0 %v668
    %748 = vmatpush.bf16.msra.mxu0 %v667
    %749 = vmatmul.bf16.gmra.mxu0 %v453
    %v750 = vpop.f32.mrf.mxu0
    %v751 = vadd.f32 %v738, %v750
    %v752 = vpop.f32.mrf.mxu0
    %753 = vdwg.mxu0
    %754 = vmatpush.bf16.msra.mxu0 %v682
    %755 = vmatpush.bf16.msra.mxu0 %v681
    %756 = vmatpush.bf16.msra.mxu0 %v680
    %757 = vmatpush.bf16.msra.mxu0 %v679
    %758 = vmatpush.bf16.msra.mxu0 %v678
    %759 = vmatpush.bf16.msra.mxu0 %v677
    %760 = vmatpush.bf16.msra.mxu0 %v676
    %761 = vmatpush.bf16.msra.mxu0 %v675
    %762 = vmatmul.bf16.gmra.mxu0 %v454
    %v763 = vpop.f32.mrf.mxu0
    %v764 = vadd.f32 %v751, %v763
    %v765 = vpop.f32.mrf.mxu0
    %766 = vdwg.mxu0
    %v767 = vpack.c.bf16 %v764, %v764
    %v768 = vunpack.c.l.bf16 %v767
    %v769 = vmax.f32 %v768, 0.0
    %v770 = vpack.c.bf16 %v769, %v769
    %v771 = vld [vmem:[#allocation12] sm:$0xf]
    %v772 = vld [vmem:[#allocation12 + $0x4] sm:$0xf]
    %v773 = vld [vmem:[#allocation12 + $0x8] sm:$0xf]
    %v774 = vld [vmem:[#allocation12 + $0xc] sm:$0xf]
    %v775 = vld [vmem:[#allocation12 + $0x10] sm:$0xf]
    %v776 = vld [vmem:[#allocation12 + $0x14] sm:$0xf]
    %v777 = vld [vmem:[#allocation12 + $0x18] sm:$0xf]
    %v778 = vld [vmem:[#allocation12 + $0x1c] sm:$0xf]
    %v779 = vld [vmem:[#allocation12 + $0x20] sm:$0xf]
    %v780 = vld [vmem:[#allocation12 + $0x24] sm:$0xf]
    %v781 = vld [vmem:[#allocation12 + $0x28] sm:$0xf]
    %v782 = vld [vmem:[#allocation12 + $0x2c] sm:$0xf]
    %v783 = vld [vmem:[#allocation12 + $0x30] sm:$0xf]
    %v784 = vld [vmem:[#allocation12 + $0x34] sm:$0xf]
    %v785 = vld [vmem:[#allocation12 + $0x38] sm:$0xf]
    %v786 = vld [vmem:[#allocation12 + $0x3c] sm:$0xf]
    %v787 = vld [vmem:[%s8] sm:$0x1]
    %v789 = vperm.slane %v787, 0
    %v807 = vunpack.c.l.b16 %v771
    %v808 = vunpack.c.l.b16 %v772
    %v809 = vunpack.c.l.b16 %v773
    %v810 = vunpack.c.l.b16 %v774
    %v811 = vunpack.c.l.b16 %v775
    %v812 = vunpack.c.l.b16 %v776
    %v813 = vunpack.c.l.b16 %v777
    %v814 = vunpack.c.l.b16 %v778
    %v815 = vunpack.c.l.b16 %v779
    %v816 = vunpack.c.l.b16 %v780
    %v817 = vunpack.c.l.b16 %v781
    %v818 = vunpack.c.l.b16 %v782
    %v819 = vunpack.c.l.b16 %v783
    %v820 = vunpack.c.l.b16 %v784
    %v821 = vunpack.c.l.b16 %v785
    %v822 = vunpack.c.l.b16 %v786
    %v823 = vpack.c.b16 %v808, %v807
    %v824 = vpack.c.b16 %v810, %v809
    %v825 = vpack.c.b16 %v812, %v811
    %v826 = vpack.c.b16 %v814, %v813
    %v827 = vpack.c.b16 %v816, %v815
    %v828 = vpack.c.b16 %v818, %v817
    %v829 = vpack.c.b16 %v820, %v819
    %v830 = vpack.c.b16 %v822, %v821
    %839 = vmatpush.bf16.msra.mxu0 %v830
    %840 = vmatpush.bf16.msra.mxu0 %v829
    %841 = vmatpush.bf16.msra.mxu0 %v828
    %842 = vmatpush.bf16.msra.mxu0 %v827
    %843 = vmatpush.bf16.msra.mxu0 %v826
    %844 = vmatpush.bf16.msra.mxu0 %v825
    %845 = vmatpush.bf16.msra.mxu0 %v824
    %846 = vmatpush.bf16.msra.mxu0 %v823
    %847 = vmatmul.bf16.gmra.mxu0 %v770
    %v848 = vpop.f32.mrf.mxu0
    %v849 = vadd.f32 %v789, %v848
    %v850 = vpop.f32.mrf.mxu0
    %851 = vdwg.mxu0
    %v852 = vpack.c.bf16 %v849, %v849
    %853 = vst [vmem:[%s9] sm:$0xf] %v852
    // Predicated region
    $region66: #{simple_decoder_forward.1} parent=1 // pred_check
      _
    $region67: #{simple_decoder_forward.1} parent=1 // pred_check_branch
      %855 = sbr.rel (0) target = $region69
    $region68: #{simple_decoder_forward.1} parent=1 // pred_region
      _
    $region69: #{simple_decoder_forward.1} parent=1 // pred_fallthru
      _
    // Predicated region
    $region70: #{simple_decoder_forward.1} parent=1 // pred_check
      _
    $region71: #{simple_decoder_forward.1} parent=1 // pred_check_branch
      %857 = sbr.rel (0) target = $region73
    $region72: #{simple_decoder_forward.1} parent=1 // pred_region
      _
    $region73: #{simple_decoder_forward.1} parent=1 // pred_fallthru
      _
    %858 = vsyncpa [#allocation3], 1
    %859 = vsyncpa [#allocation5], 1
    %860 = vsyncpa [#allocation8], 1
    %861 = vsyncpa [#allocation11], 1

</llo_original>
